<compile_context>
chip_gen: v5e
topology: v5e:2x2
jax: 0.10.0
libtpu: 0.0.40
codegen_flags: <defaults>
</compile_context>

<pallas_src>
import math
import functools

import numpy as np
import jax
import jax.numpy as jnp
from jax import lax
from jax.experimental import pallas as pl
from jax.experimental.pallas import tpu as pltpu


def _round_up(x, m):
    return ((x + m - 1) // m) * m


# ----------------------------------------------------------------------------
# One-time parameter preparation (all time-invariant work hoisted here).
# ----------------------------------------------------------------------------
def prepare_params(w_in, w_rec_plus, w_out, *, dt=0.1, tau=100.0):
    """Precompute padded, alpha-folded, MXU-dtype weights once.

    w_rec = w_rec_plus @ diag(d)  == scale column j of w_rec_plus by d[j],
    with d = +1 for units i < 0.8*N (Python float compare, matching the
    PyTorch construction) and -1 otherwise.
    """
    alpha = dt / tau
    N, N_in = w_in.shape
    N_out = w_out.shape[1]
    N_pad = _round_up(N, 128)          # lane-dense hidden dim
    N_out_pad = _round_up(N_out, 128)  # lane-dense output dim

    # Integer/float split identical to the PyTorch loop `if i < 0.8*hidden_size`
    # (computed in float64, like Python does).
    d_sign = np.where(np.arange(N) < 0.8 * N, 1.0, -1.0).astype(np.float32)
    d_sign = jnp.asarray(d_sign)

    w_rec_eff = alpha * (w_rec_plus.astype(jnp.float32) * d_sign[None, :])  # (N, N)
    w_rec_pad = (jnp.zeros((N_pad, N_pad), jnp.float32)
                 .at[:N, :N].set(w_rec_eff)).astype(jnp.bfloat16)

    w_in_t_eff = alpha * jnp.transpose(w_in.astype(jnp.float32))            # (N_in, N)
    w_in_t_pad = (jnp.zeros((N_in, N_pad), jnp.float32)
                  .at[:, :N].set(w_in_t_eff))                               # f32 (used in prep matmul)

    w_out_pad = (jnp.zeros((N_pad, N_out_pad), jnp.float32)
                 .at[:N, :N_out].set(w_out.astype(jnp.float32))).astype(jnp.bfloat16)

    return {
        "w_rec": w_rec_pad,       # (N_pad, N_pad)  bf16, alpha-folded, sign-applied
        "w_in_t": w_in_t_pad,     # (N_in, N_pad)   f32,  alpha-folded
        "w_out": w_out_pad,       # (N_pad, N_out_pad) bf16
        "alpha": alpha,
        "n": N, "n_in": N_in, "n_out": N_out,
        "n_pad": N_pad, "n_out_pad": N_out_pad,
    }


# ----------------------------------------------------------------------------
# Single-step cell kernel (exact module.forward semantics, padded dims).
# ----------------------------------------------------------------------------
def _eirnn_cell_kernel(prev_ref, inp_ref, w_in_t_ref, w_rec_ref, w_out_ref,
                       state_ref, out_ref, *, one_minus_alpha, noise_const):
    prev = prev_ref[...]                                          # (Bp, Np) f32
    rect_prev = jnp.maximum(prev, 0.0)

    # rect(prev) @ (alpha * w_rec)  — bf16 operands, f32 accumulate.
    hidden = jnp.dot(rect_prev.astype(jnp.bfloat16), w_rec_ref[...],
                     preferred_element_type=jnp.float32)          # (Bp, Np)
    # torch.mv(w_in, input_) as (1, N_in) @ (N_in, Np); alpha already folded.
    input_w = jnp.dot(inp_ref[...], w_in_t_ref[...],
                      preferred_element_type=jnp.float32)         # (1, Np)

    state = one_minus_alpha * prev + hidden + input_w + noise_const
    state_ref[...] = state
    out_ref[...] = jnp.dot(jnp.maximum(state, 0.0).astype(jnp.bfloat16),
                           w_out_ref[...],
                           preferred_element_type=jnp.float32)


def eirnn_cell_forward(input_, prev_state, params, *, var_rec=0.001):
    """One EIRnnCell step. Returns (state, output) with unpadded shapes."""
    alpha = params["alpha"]
    noise_const = math.sqrt(2.0 * alpha * var_rec) * 0.001

    B, N = prev_state.shape
    N_pad, N_out_pad = params["n_pad"], params["n_out_pad"]
    N_out = params["n_out"]
    B_pad = _round_up(max(B, 8), 8)

    prev_pad = (jnp.zeros((B_pad, N_pad), jnp.float32)
                .at[:B, :N].set(prev_state.astype(jnp.float32)))
    inp2d = input_.reshape(1, -1).astype(jnp.float32)             # (1, N_in)

    kernel = functools.partial(_eirnn_cell_kernel,
                               one_minus_alpha=1.0 - alpha,
                               noise_const=noise_const)
    vmem = pl.BlockSpec(memory_space=pltpu.MemorySpace.VMEM)
    state, output = pl.pallas_call(
        kernel,
        out_shape=(jax.ShapeDtypeStruct((B_pad, N_pad), jnp.float32),
                   jax.ShapeDtypeStruct((B_pad, N_out_pad), jnp.float32)),
        in_specs=[vmem] * 5,
        out_specs=(vmem, vmem),
    )(prev_pad, inp2d, params["w_in_t"], params["w_rec"], params["w_out"])
    return state[:B, :N], output[:B, :N_out]


# ----------------------------------------------------------------------------
# Whole-sequence recurrence: K timesteps per grid step, fused output epilogue.
# ----------------------------------------------------------------------------
def _eirnn_seq_kernel(init_ref, bias_ref, w_rec_ref, w_out_ref,
                      states_ref, out_ref, carry_ref, *, one_minus_alpha):
    c = pl.program_id(0)

    @pl.when(c == 0)
    def _():
        carry_ref[...] = init_ref[...]

    k_steps, b_pad, n_pad = states_ref.shape
    n_out_pad = out_ref.shape[-1]

    def step(t, prev):
        rect_prev = jnp.maximum(prev, 0.0)
        hidden = jnp.dot(rect_prev.astype(jnp.bfloat16), w_rec_ref[...],
                         preferred_element_type=jnp.float32)      # (Bp, Np)
        # bias_ref[t]: (1, Np) precomputed  alpha*(w_in @ input_t) + noise_const
        state = one_minus_alpha * prev + hidden + bias_ref[t]
        states_ref[t] = state
        return state

    # Unrolled so the LLO scheduler can overlap consecutive steps' work.
    final_state = lax.fori_loop(0, k_steps, step, carry_ref[...], unroll=True)
    carry_ref[...] = final_state

    # Fused projection epilogue for the whole chunk: relu(states) @ w_out.
    rect_states = jnp.maximum(states_ref[...], 0.0)               # (K, Bp, Np)
    out_ref[...] = jnp.dot(
        rect_states.reshape(k_steps * b_pad, n_pad).astype(jnp.bfloat16),
        w_out_ref[...],
        preferred_element_type=jnp.float32,
    ).reshape(k_steps, b_pad, n_out_pad)


def eirnn_sequence_forward(inputs, init_state, params, *, var_rec=0.001, chunk=8):
    """Run the cell over a (T, N_in) input sequence.

    Returns (states, outputs) of shapes (T, B, N) and (T, B, N_out); step t
    matches module.forward applied sequentially.
    """
    alpha = params["alpha"]
    noise_const = math.sqrt(2.0 * alpha * var_rec) * 0.001

    T, _ = inputs.shape
    B, N = init_state.shape
    N_out = params["n_out"]
    N_pad, N_out_pad = params["n_pad"], params["n_out_pad"]
    B_pad = _round_up(max(B, 8), 8)

    K = min(chunk, T)
    num_chunks = pl.cdiv(T, K)
    T_pad = num_chunks * K

    # One-time input projection for the whole sequence (alpha + noise folded).
    bias = jnp.dot(inputs.astype(jnp.float32), params["w_in_t"]) + noise_const  # (T, Np)
    if T_pad > T:
        bias = jnp.pad(bias, ((0, T_pad - T), (0, 0)))
    bias = bias.reshape(T_pad, 1, N_pad)

    init_pad = (jnp.zeros((B_pad, N_pad), jnp.float32)
                .at[:B, :N].set(init_state.astype(jnp.float32)))

    kernel = functools.partial(_eirnn_seq_kernel, one_minus_alpha=1.0 - alpha)

    states_pad, outputs_pad = pl.pallas_call(
        kernel,
        out_shape=(jax.ShapeDtypeStruct((T_pad, B_pad, N_pad), jnp.float32),
                   jax.ShapeDtypeStruct((T_pad, B_pad, N_out_pad), jnp.float32)),
        grid_spec=pltpu.PrefetchScalarGridSpec(
            num_scalar_prefetch=0,
            grid=(num_chunks,),
            in_specs=[
                pl.BlockSpec((B_pad, N_pad), lambda c: (0, 0)),        # init state (resident)
                pl.BlockSpec((K, 1, N_pad), lambda c: (c, 0, 0)),      # per-chunk input bias
                pl.BlockSpec((N_pad, N_pad), lambda c: (0, 0)),        # w_rec (resident, bf16)
                pl.BlockSpec((N_pad, N_out_pad), lambda c: (0, 0)),    # w_out (resident, bf16)
            ],
            out_specs=(
                pl.BlockSpec((K, B_pad, N_pad), lambda c: (c, 0, 0)),      # states chunk
                pl.BlockSpec((K, B_pad, N_out_pad), lambda c: (c, 0, 0)),  # outputs chunk
            ),
            scratch_shapes=[pltpu.VMEM((B_pad, N_pad), jnp.float32)],      # carried state
        ),
        # Serial recurrence over chunks. For large N, also set
        # vmem_limit_bytes here (esp. v7x's 64 MiB physical VMEM).
        compiler_params=pltpu.CompilerParams(
            dimension_semantics=("arbitrary",)),
    )(init_pad, bias, params["w_rec"], params["w_out"])

    states = states_pad[:T, :B, :N]
    outputs = outputs_pad[:T, :B, :N_out]
    return states, outputs


# ----------------------------------------------------------------------------
# Pure-JAX f32 reference (mirror of the PyTorch forward).
# ----------------------------------------------------------------------------
def _reference_cell(input_, prev_state, w_in, w_rec_plus, w_out,
                    *, var_rec=0.001, dt=0.1, tau=100.0):
    alpha = dt / tau
    N = w_rec_plus.shape[0]
    d_sign = jnp.asarray(np.where(np.arange(N) < 0.8 * N, 1.0, -1.0)
                         .astype(np.float32))
    rect_prev = jnp.maximum(prev_state, 0.0)
    w_rec = w_rec_plus * d_sign[None, :]                 # == w_rec_plus @ diag(d)
    hidden_w = rect_prev @ w_rec
    input_w = w_in @ input_                              # (N,)
    state = ((1.0 - alpha) * prev_state + alpha * (hidden_w + input_w[None, :])
             + math.sqrt(2.0 * alpha * var_rec) * 0.001)
    output = jnp.maximum(state, 0.0) @ w_out
    return state, output


if __name__ == "__main__":
    batch = 2
    hidden_size = 32
    embedding_dim = 16
    output_size = 8
    seq_len = 8

    key = jax.random.PRNGKey(0)
    k1, k2, k3, k4, k5 = jax.random.split(key, 5)

    # Deterministic "__init__" parameters: relu(randn(...)), as in the module.
    w_in = jnp.maximum(jax.random.normal(k1, (hidden_size, embedding_dim),
                                         jnp.float32), 0.0)
    w_rec_plus = jnp.maximum(jax.random.normal(k2, (hidden_size, hidden_size),
                                               jnp.float32), 0.0)
    w_out = jnp.maximum(jax.random.normal(k3, (hidden_size, output_size),
                                          jnp.float32), 0.0)

    inputs = jax.random.normal(k4, (seq_len, embedding_dim), jnp.float32)
    prev_state = jax.random.normal(k5, (batch, hidden_size), jnp.float32)

    params = prepare_params(w_in, w_rec_plus, w_out)   # one-time hoisted prep

    # --- single-step cell (module.forward semantics) ---
    state, output = eirnn_cell_forward(inputs[0], prev_state, params)
    jax.block_until_ready((state, output))
    ref_state, ref_output = _reference_cell(inputs[0], prev_state,
                                            w_in, w_rec_plus, w_out)
    assert state.shape == (batch, hidden_size)
    assert output.shape == (batch, output_size)
    # Tolerances relaxed vs f32 reference because matmul operands are bf16.
    assert jnp.allclose(state, ref_state, atol=1e-3, rtol=1e-3)
    assert jnp.allclose(output, ref_output, atol=5e-2, rtol=2e-2)

    # --- whole-sequence recurrence (chunked grid, fused projection) ---
    states, outputs = eirnn_sequence_forward(inputs, prev_state, params)
    jax.block_until_ready((states, outputs))

    ref_states, ref_outputs = [], []
    s = prev_state
    for t in range(seq_len):
        s, o = _reference_cell(inputs[t], s, w_in, w_rec_plus, w_out)
        ref_states.append(s)
        ref_outputs.append(o)
    ref_states = jnp.stack(ref_states)
    ref_outputs = jnp.stack(ref_outputs)

    assert states.shape == (seq_len, batch, hidden_size)
    assert outputs.shape == (seq_len, batch, output_size)
    assert jnp.allclose(states, ref_states, atol=2e-3, rtol=1e-3)
    assert jnp.allclose(outputs, ref_outputs, atol=5e-2, rtol=2e-2)

    print("KERNEL_OK")
</pallas_src>

<mosaic_0001>
module attributes {stable_mosaic.version = 11 : i64} {
  func.func @_eirnn_cell_kernel(%arg0: memref<8x128xf32, #tpu.memory_space<vmem>>, %arg1: memref<1x16xf32, #tpu.memory_space<vmem>>, %arg2: memref<16x128xf32, #tpu.memory_space<vmem>>, %arg3: memref<128x128xbf16, #tpu.memory_space<vmem>>, %arg4: memref<128x128xbf16, #tpu.memory_space<vmem>>, %arg5: memref<8x128xf32, #tpu.memory_space<vmem>>, %arg6: memref<8x128xf32, #tpu.memory_space<vmem>>) attributes {dimension_semantics = [], scalar_prefetch = 0 : i64, scratch_operands = 0 : i64, tpu.core_type = #tpu.core_type<tc>} {
    %c0 = arith.constant 0 : index
    %c0_0 = arith.constant 0 : index
    %0 = vector.load %arg0[%c0, %c0_0] : memref<8x128xf32, #tpu.memory_space<vmem>>, vector<8x128xf32>
    %cst = arith.constant 0.000000e+00 : f32
    %1 = vector.broadcast %cst : f32 to vector<8x128xf32>
    %2 = arith.maximumf %0, %1 : vector<8x128xf32>
    %3 = arith.truncf %2 : vector<8x128xf32> to vector<8x128xbf16>
    %c0_1 = arith.constant 0 : index
    %c0_2 = arith.constant 0 : index
    %4 = vector.load %arg3[%c0_1, %c0_2] : memref<128x128xbf16, #tpu.memory_space<vmem>>, vector<128x128xbf16>
    %cst_3 = arith.constant dense<0.000000e+00> : vector<8x128xf32>
    %5 = tpu.matmul %3, %4, %cst_3 {dimension_numbers = #tpu.dot_dimension_numbers<[1], [0], [0], [1], [0, 0, 1, 1], [], []>} : vector<8x128xbf16>, vector<128x128xbf16>, vector<8x128xf32> -> vector<8x128xf32>
    %c0_4 = arith.constant 0 : index
    %c0_5 = arith.constant 0 : index
    %6 = vector.load %arg1[%c0_4, %c0_5] : memref<1x16xf32, #tpu.memory_space<vmem>>, vector<1x16xf32>
    %c0_6 = arith.constant 0 : index
    %c0_7 = arith.constant 0 : index
    %7 = vector.load %arg2[%c0_6, %c0_7] : memref<16x128xf32, #tpu.memory_space<vmem>>, vector<16x128xf32>
    %cst_8 = arith.constant dense<0.000000e+00> : vector<1x128xf32>
    %8 = tpu.matmul %6, %7, %cst_8 {dimension_numbers = #tpu.dot_dimension_numbers<[1], [0], [0], [1], [0, 0, 1, 1], [], []>} : vector<1x16xf32>, vector<16x128xf32>, vector<1x128xf32> -> vector<1x128xf32>
    %cst_9 = arith.constant 9.990000e-01 : f32
    %9 = vector.broadcast %cst_9 : f32 to vector<8x128xf32>
    %10 = arith.mulf %9, %0 : vector<8x128xf32>
    %11 = arith.addf %10, %5 : vector<8x128xf32>
    %12 = vector.broadcast %8 : vector<1x128xf32> to vector<8x128xf32>
    %13 = arith.addf %11, %12 : vector<8x128xf32>
    %cst_10 = arith.constant 1.41421356E-6 : f32
    %14 = vector.broadcast %cst_10 : f32 to vector<8x128xf32>
    %15 = arith.addf %13, %14 : vector<8x128xf32>
    %c0_11 = arith.constant 0 : index
    %c0_12 = arith.constant 0 : index
    %16 = vector.load %arg5[%c0_11, %c0_12] : memref<8x128xf32, #tpu.memory_space<vmem>>, vector<8x128xf32>
    tpu.vector_store %arg5[%c0_11, %c0_12], %15 {strides = array<i32>} : memref<8x128xf32, #tpu.memory_space<vmem>>, vector<8x128xf32>,
    %cst_13 = arith.constant 0.000000e+00 : f32
    %17 = vector.broadcast %cst_13 : f32 to vector<8x128xf32>
    %18 = arith.maximumf %15, %17 : vector<8x128xf32>
    %19 = arith.truncf %18 : vector<8x128xf32> to vector<8x128xbf16>
    %c0_14 = arith.constant 0 : index
    %c0_15 = arith.constant 0 : index
    %20 = vector.load %arg4[%c0_14, %c0_15] : memref<128x128xbf16, #tpu.memory_space<vmem>>, vector<128x128xbf16>
    %cst_16 = arith.constant dense<0.000000e+00> : vector<8x128xf32>
    %21 = tpu.matmul %19, %20, %cst_16 {dimension_numbers = #tpu.dot_dimension_numbers<[1], [0], [0], [1], [0, 0, 1, 1], [], []>} : vector<8x128xbf16>, vector<128x128xbf16>, vector<8x128xf32> -> vector<8x128xf32>
    %c0_17 = arith.constant 0 : index
    %c0_18 = arith.constant 0 : index
    %22 = vector.load %arg6[%c0_17, %c0_18] : memref<8x128xf32, #tpu.memory_space<vmem>>, vector<8x128xf32>
    tpu.vector_store %arg6[%c0_17, %c0_18], %21 {strides = array<i32>} : memref<8x128xf32, #tpu.memory_space<vmem>>, vector<8x128xf32>,
    return
  }
}

</mosaic_0001>

<llo_original>
// kernel: tpu_custom_call.1
$region0: #{tpu_custom_call.1}
  #allocation0 [shape = 'u32[]', space=smem, size = 0x4, offset = 0x4, fixed_abs, tag = 'smem constant byte address 0x4 - core index']
  #allocation1 [shape = 'u32[72,128]{1,0:T(1,128)}', space=vmem, size = 0x9000, scoped, tag = 'internal scratch']
  %s0 = inlined_call_operand.hbm [shape: f32[8,128], index: 0, kind: input, shape index: {}]
  %s1 = inlined_call_operand.hbm [shape: f32[1,16], index: 1, kind: input, shape index: {}]
  %s2 = inlined_call_operand.hbm [shape: f32[16,128], index: 2, kind: input, shape index: {}]
  %s3 = inlined_call_operand.hbm [shape: bf16[128,128], index: 3, kind: input, shape index: {}]
  %s4 = inlined_call_operand.hbm [shape: bf16[128,128], index: 4, kind: input, shape index: {}]
  %s5 = inlined_call_operand.hbm [shape: f32[8,128], index: 5, kind: output, shape index: {0}]
  %s6 = inlined_call_operand.hbm [shape: f32[8,128], index: 6, kind: output, shape index: {1}]
  %7 = xla_tuple %s5, %s6
  %s8 = sld [smem:[#allocation0]]
  $region58: #{tpu_custom_call.1} parent=0
    _
  %s10 = ssub.s32 1, %s8
  %s11 = scalar_select 0, %s10, %s8
  $region1: #{tpu_custom_call.1} parent=0
    #allocation2 [shape = 'u8[4096]{0}', space=vmem, size = 0x1000, scoped, tag = 'input window, operand 0, single buffered']
    #allocation3 [shape = 's32[1]{0}', space=sflag, size = 0x4, scoped, tag = 'scoped memory for tpu_custom_call.1']
    #allocation4 [shape = 's32[1]{0}', space=sflag, size = 0x4, scoped, tag = 'scoped memory for tpu_custom_call.1']
    #allocation5 [shape = 'u8[512]{0}', space=vmem, size = 0x400, scoped, tag = 'input window, operand 1, single buffered']
    #allocation6 [shape = 's32[1]{0}', space=sflag, size = 0x4, scoped, tag = 'scoped memory for tpu_custom_call.1']
    #allocation7 [shape = 'u8[8192]{0}', space=vmem, size = 0x2000, scoped, tag = 'input window, operand 2, single buffered']
    #allocation8 [shape = 'u8[32768]{0}', space=vmem, size = 0x8000, scoped, tag = 'input window, operand 3, single buffered']
    #allocation9 [shape = 's32[1]{0}', space=sflag, size = 0x4, scoped, tag = 'scoped memory for tpu_custom_call.1']
    #allocation10 [shape = 'u8[32768]{0}', space=vmem, size = 0x8000, scoped, tag = 'input window, operand 4, single buffered']
    #allocation11 [shape = 'u8[4096]{0}', space=vmem, size = 0x1000, scoped, tag = 'output window, operand 0, single buffered']
    #allocation12 [shape = 'u8[4096]{0}', space=vmem, size = 0x1000, scoped, tag = 'output window, operand 1, single buffered']
    #allocation13 [shape = 's32[1]{0}', space=sflag, size = 0x4, scoped, tag = 'scoped memory for tpu_custom_call.1']
    %12 = vsyncpa [#allocation3], 0
    %13 = vsyncpa [#allocation6], 0
    %14 = vsyncpa [#allocation9], 0
    %15 = vsyncpa [#allocation4], 0
    %16 = vsyncpa [#allocation13], 0
    // Predicated region
    $region2: #{tpu_custom_call.1} parent=1 // pred_check
      _
    $region3: #{tpu_custom_call.1} parent=1 // pred_check_branch
      %18 = sbr.rel (0) target = $region5
    $region4: #{tpu_custom_call.1} parent=1 // pred_region
      %20 = vsyncadd [#allocation3], 0
      %s22 = sshll.u32 %s0, 4
      %s23 = int_to_ptr.hbm [resolvable:$true] %s22
      %s24 = sshll.u32 [#allocation2], 4
      %s25 = int_to_ptr.vmem [resolvable:$true] %s24
      %27 = dma.hbm_to_vmem [thread:$0]  %s23, 128, %s25, [#allocation3]
    $region5: #{tpu_custom_call.1} parent=1 // pred_fallthru
      _
    // Predicated region
    $region6: #{tpu_custom_call.1} parent=1 // pred_check
      _
    $region7: #{tpu_custom_call.1} parent=1 // pred_check_branch
      %29 = sbr.rel (0) target = $region9
    $region8: #{tpu_custom_call.1} parent=1 // pred_region
      %31 = vsyncadd [#allocation6], 0
      %s33 = sshll.u32 %s1, 4
      %s34 = int_to_ptr.hbm [resolvable:$true] %s33
      %s35 = sshll.u32 [#allocation5], 4
      %s36 = int_to_ptr.vmem [resolvable:$true] %s35
      %38 = dma.hbm_to_vmem [thread:$0]  %s34, 16, %s36, [#allocation6]
    $region9: #{tpu_custom_call.1} parent=1 // pred_fallthru
      _
    // Predicated region
    $region10: #{tpu_custom_call.1} parent=1 // pred_check
      _
    $region11: #{tpu_custom_call.1} parent=1 // pred_check_branch
      %40 = sbr.rel (0) target = $region13
    $region12: #{tpu_custom_call.1} parent=1 // pred_region
      %42 = vsyncadd [#allocation6], 0
      %s43 = sshll.u32 %s2, 4
      %s44 = int_to_ptr.hbm [resolvable:$true] %s43
      %s45 = sshll.u32 [#allocation7], 4
      %s46 = int_to_ptr.vmem [resolvable:$true] %s45
      %51 = dma.hbm_to_vmem [thread:$0]  %s44, 256, %s46, [#allocation6], 128, 128, 8
    $region13: #{tpu_custom_call.1} parent=1 // pred_fallthru
      _
    // Predicated region
    $region14: #{tpu_custom_call.1} parent=1 // pred_check
      _
    $region15: #{tpu_custom_call.1} parent=1 // pred_check_branch
      %53 = sbr.rel (0) target = $region17
    $region16: #{tpu_custom_call.1} parent=1 // pred_region
      %55 = vsyncadd [#allocation9], 0
      %s56 = sshll.u32 %s3, 4
      %s57 = int_to_ptr.hbm [resolvable:$true] %s56
      %s58 = sshll.u32 [#allocation8], 4
      %s59 = int_to_ptr.vmem [resolvable:$true] %s58
      %64 = dma.hbm_to_vmem [thread:$0]  %s57, 1024, %s59, [#allocation9], 64, 64, 4
    $region17: #{tpu_custom_call.1} parent=1 // pred_fallthru
      _
    // Predicated region
    $region18: #{tpu_custom_call.1} parent=1 // pred_check
      _
    $region19: #{tpu_custom_call.1} parent=1 // pred_check_branch
      %66 = sbr.rel (0) target = $region21
    $region20: #{tpu_custom_call.1} parent=1 // pred_region
      %68 = vsyncadd [#allocation9], 0
      %s69 = sshll.u32 %s4, 4
      %s70 = int_to_ptr.hbm [resolvable:$true] %s69
      %s71 = sshll.u32 [#allocation10], 4
      %s72 = int_to_ptr.vmem [resolvable:$true] %s71
      %77 = dma.hbm_to_vmem [thread:$0]  %s70, 1024, %s72, [#allocation9], 64, 64, 4
    $region21: #{tpu_custom_call.1} parent=1 // pred_fallthru
      _
    // Predicated region
    $region22: #{tpu_custom_call.1} parent=1 // pred_check
      _
    $region23: #{tpu_custom_call.1} parent=1 // pred_check_branch
      %79 = sbr.rel (0) target = $region25
    $region24: #{tpu_custom_call.1} parent=1 // pred_region
      %81 = dma.done [#allocation3], 128
    $region25: #{tpu_custom_call.1} parent=1 // pred_fallthru
      _
    // Predicated region
    $region26: #{tpu_custom_call.1} parent=1 // pred_check
      _
    $region27: #{tpu_custom_call.1} parent=1 // pred_check_branch
      %83 = sbr.rel (0) target = $region29
    $region28: #{tpu_custom_call.1} parent=1 // pred_region
      %85 = dma.done [#allocation6], 16
    $region29: #{tpu_custom_call.1} parent=1 // pred_fallthru
      _
    // Predicated region
    $region30: #{tpu_custom_call.1} parent=1 // pred_check
      _
    $region31: #{tpu_custom_call.1} parent=1 // pred_check_branch
      %87 = sbr.rel (0) target = $region33
    $region32: #{tpu_custom_call.1} parent=1 // pred_region
      %89 = dma.done [#allocation6], 256
    $region33: #{tpu_custom_call.1} parent=1 // pred_fallthru
      _
    // Predicated region
    $region34: #{tpu_custom_call.1} parent=1 // pred_check
      _
    $region35: #{tpu_custom_call.1} parent=1 // pred_check_branch
      %91 = sbr.rel (0) target = $region37
    $region36: #{tpu_custom_call.1} parent=1 // pred_region
      %93 = dma.done [#allocation9], 1024
    $region37: #{tpu_custom_call.1} parent=1 // pred_fallthru
      _
    // Predicated region
    $region38: #{tpu_custom_call.1} parent=1 // pred_check
      _
    $region39: #{tpu_custom_call.1} parent=1 // pred_check_branch
      %95 = sbr.rel (0) target = $region41
    $region40: #{tpu_custom_call.1} parent=1 // pred_region
      %97 = dma.done [#allocation9], 1024
    $region41: #{tpu_custom_call.1} parent=1 // pred_fallthru
      _
    %v98 = vld [vmem:[#allocation2] sm:$0xff]
    %v99 = vmax.f32 %v98, 0.0
    %v100 = vpack.c.bf16 %v99, %v99
    %v101 = vld [vmem:[#allocation8] sm:$0xf]
    %v102 = vld [vmem:[#allocation8 + $0x4] sm:$0xf]
    %v103 = vld [vmem:[#allocation8 + $0x8] sm:$0xf]
    %v104 = vld [vmem:[#allocation8 + $0xc] sm:$0xf]
    %v105 = vld [vmem:[#allocation8 + $0x10] sm:$0xf]
    %v106 = vld [vmem:[#allocation8 + $0x14] sm:$0xf]
    %v107 = vld [vmem:[#allocation8 + $0x18] sm:$0xf]
    %v108 = vld [vmem:[#allocation8 + $0x1c] sm:$0xf]
    %v109 = vld [vmem:[#allocation8 + $0x20] sm:$0xf]
    %v110 = vld [vmem:[#allocation8 + $0x24] sm:$0xf]
    %v111 = vld [vmem:[#allocation8 + $0x28] sm:$0xf]
    %v112 = vld [vmem:[#allocation8 + $0x2c] sm:$0xf]
    %v113 = vld [vmem:[#allocation8 + $0x30] sm:$0xf]
    %v114 = vld [vmem:[#allocation8 + $0x34] sm:$0xf]
    %v115 = vld [vmem:[#allocation8 + $0x38] sm:$0xf]
    %v116 = vld [vmem:[#allocation8 + $0x3c] sm:$0xf]
    %v133 = vunpack.c.l.b16 %v101
    %v134 = vunpack.c.l.b16 %v102
    %v135 = vunpack.c.l.b16 %v103
    %v136 = vunpack.c.l.b16 %v104
    %v137 = vunpack.c.l.b16 %v105
    %v138 = vunpack.c.l.b16 %v106
    %v139 = vunpack.c.l.b16 %v107
    %v140 = vunpack.c.l.b16 %v108
    %v141 = vunpack.c.l.b16 %v109
    %v142 = vunpack.c.l.b16 %v110
    %v143 = vunpack.c.l.b16 %v111
    %v144 = vunpack.c.l.b16 %v112
    %v145 = vunpack.c.l.b16 %v113
    %v146 = vunpack.c.l.b16 %v114
    %v147 = vunpack.c.l.b16 %v115
    %v148 = vunpack.c.l.b16 %v116
    %v149 = vpack.c.b16 %v134, %v133
    %v150 = vpack.c.b16 %v136, %v135
    %v151 = vpack.c.b16 %v138, %v137
    %v152 = vpack.c.b16 %v140, %v139
    %v153 = vpack.c.b16 %v142, %v141
    %v154 = vpack.c.b16 %v144, %v143
    %v155 = vpack.c.b16 %v146, %v145
    %v156 = vpack.c.b16 %v148, %v147
    %165 = vmatpush.bf16.msra.mxu0 %v156
    %166 = vmatpush.bf16.msra.mxu0 %v155
    %167 = vmatpush.bf16.msra.mxu0 %v154
    %168 = vmatpush.bf16.msra.mxu0 %v153
    %169 = vmatpush.bf16.msra.mxu0 %v152
    %170 = vmatpush.bf16.msra.mxu0 %v151
    %171 = vmatpush.bf16.msra.mxu0 %v150
    %172 = vmatpush.bf16.msra.mxu0 %v149
    %173 = vmatmul.bf16.gmra.mxu0 %v100
    %v174 = vpop.f32.mrf.mxu0
    %v175 = vadd.f32 0.0, %v174
    %v176 = vpop.f32.mrf.mxu0
    %177 = vdwg.mxu0
    %v178 = vld [vmem:[#allocation5] sm:$0x1]
    %v179 = vld [vmem:[#allocation7] sm:$0xff]
    %v180 = vld [vmem:[#allocation7 + $0x8] sm:$0xff]
    %vm181 = vcmask 130048
    %v183 = vsel %vm181, %v178, 0
    %185 = vmatpush.msra.mxu0 0.0
    %186 = vmatpush.msra.mxu0 0.0
    %187 = vmatpush.msra.mxu0 0.0
    %188 = vmatpush.msra.mxu0 0.0
    %189 = vmatpush.msra.mxu0 0.0
    %190 = vmatpush.msra.mxu0 0.0
    %191 = vmatpush.msra.mxu0 0.0
    %192 = vmatpush.msra.mxu0 0.0
    %193 = vmatpush.msra.mxu0 0.0
    %194 = vmatpush.msra.mxu0 0.0
    %195 = vmatpush.msra.mxu0 0.0
    %196 = vmatpush.msra.mxu0 0.0
    %197 = vmatpush.msra.mxu0 0.0
    %198 = vmatpush.msra.mxu0 0.0
    %199 = vmatpush.msra.mxu0 %v180
    %200 = vmatpush.msra.mxu0 %v179
    %201 = vmatmul.f32.gmra.mxu0 %v183
    %v202 = vpop.f32.mrf.mxu0
    %v203 = vadd.f32 0.0, %v202
    %204 = vdwg.mxu0
    %v205 = vmul.f32 %v98, 0.999
    %v206 = vadd.f32 %v205, %v175
    %v207 = vperm.slane %v203, 0
    %v208 = vadd.f32 %v206, %v207
    %v209 = vadd.f32 %v208, 1.4142136e-06
    %210 = vst [vmem:[#allocation11] sm:$0xff] %v209
    %v211 = vmax.f32 %v209, 0.0
    %v212 = vpack.c.bf16 %v211, %v211
    %v213 = vld [vmem:[#allocation10] sm:$0xf]
    %v214 = vld [vmem:[#allocation10 + $0x4] sm:$0xf]
    %v215 = vld [vmem:[#allocation10 + $0x8] sm:$0xf]
    %v216 = vld [vmem:[#allocation10 + $0xc] sm:$0xf]
    %v217 = vld [vmem:[#allocation10 + $0x10] sm:$0xf]
    %v218 = vld [vmem:[#allocation10 + $0x14] sm:$0xf]
    %v219 = vld [vmem:[#allocation10 + $0x18] sm:$0xf]
    %v220 = vld [vmem:[#allocation10 + $0x1c] sm:$0xf]
    %v221 = vld [vmem:[#allocation10 + $0x20] sm:$0xf]
    %v222 = vld [vmem:[#allocation10 + $0x24] sm:$0xf]
    %v223 = vld [vmem:[#allocation10 + $0x28] sm:$0xf]
    %v224 = vld [vmem:[#allocation10 + $0x2c] sm:$0xf]
    %v225 = vld [vmem:[#allocation10 + $0x30] sm:$0xf]
    %v226 = vld [vmem:[#allocation10 + $0x34] sm:$0xf]
    %v227 = vld [vmem:[#allocation10 + $0x38] sm:$0xf]
    %v228 = vld [vmem:[#allocation10 + $0x3c] sm:$0xf]
    %v245 = vunpack.c.l.b16 %v213
    %v246 = vunpack.c.l.b16 %v214
    %v247 = vunpack.c.l.b16 %v215
    %v248 = vunpack.c.l.b16 %v216
    %v249 = vunpack.c.l.b16 %v217
    %v250 = vunpack.c.l.b16 %v218
    %v251 = vunpack.c.l.b16 %v219
    %v252 = vunpack.c.l.b16 %v220
    %v253 = vunpack.c.l.b16 %v221
    %v254 = vunpack.c.l.b16 %v222
    %v255 = vunpack.c.l.b16 %v223
    %v256 = vunpack.c.l.b16 %v224
    %v257 = vunpack.c.l.b16 %v225
    %v258 = vunpack.c.l.b16 %v226
    %v259 = vunpack.c.l.b16 %v227
    %v260 = vunpack.c.l.b16 %v228
    %v261 = vpack.c.b16 %v246, %v245
    %v262 = vpack.c.b16 %v248, %v247
    %v263 = vpack.c.b16 %v250, %v249
    %v264 = vpack.c.b16 %v252, %v251
    %v265 = vpack.c.b16 %v254, %v253
    %v266 = vpack.c.b16 %v256, %v255
    %v267 = vpack.c.b16 %v258, %v257
    %v268 = vpack.c.b16 %v260, %v259
    %277 = vmatpush.bf16.msra.mxu0 %v268
    %278 = vmatpush.bf16.msra.mxu0 %v267
    %279 = vmatpush.bf16.msra.mxu0 %v266
    %280 = vmatpush.bf16.msra.mxu0 %v265
    %281 = vmatpush.bf16.msra.mxu0 %v264
    %282 = vmatpush.bf16.msra.mxu0 %v263
    %283 = vmatpush.bf16.msra.mxu0 %v262
    %284 = vmatpush.bf16.msra.mxu0 %v261
    %285 = vmatmul.bf16.gmra.mxu0 %v212
    %v286 = vpop.f32.mrf.mxu0
    %v287 = vadd.f32 0.0, %v286
    %v288 = vpop.f32.mrf.mxu0
    %289 = vdwg.mxu0
    %290 = vst [vmem:[#allocation12] sm:$0xff] %v287
    // Predicated region
    $region42: #{tpu_custom_call.1} parent=1 // pred_check
      _
    $region43: #{tpu_custom_call.1} parent=1 // pred_check_branch
      %292 = sbr.rel (0) target = $region45
    $region44: #{tpu_custom_call.1} parent=1 // pred_region
      %294 = vsyncadd [#allocation4], 0
      %s296 = sshll.u32 [#allocation11], 4
      %s297 = int_to_ptr.vmem [resolvable:$true] %s296
      %s298 = sshll.u32 %s5, 4
      %s299 = int_to_ptr.hbm [resolvable:$true] %s298
      %301 = dma.vmem_to_hbm [thread:$0]  %s297, 128, %s299, [#allocation4]
    $region45: #{tpu_custom_call.1} parent=1 // pred_fallthru
      _
    // Predicated region
    $region46: #{tpu_custom_call.1} parent=1 // pred_check
      _
    $region47: #{tpu_custom_call.1} parent=1 // pred_check_branch
      %303 = sbr.rel (0) target = $region49
    $region48: #{tpu_custom_call.1} parent=1 // pred_region
      %305 = vsyncadd [#allocation13], 0
      %s307 = sshll.u32 [#allocation12], 4
      %s308 = int_to_ptr.vmem [resolvable:$true] %s307
      %s309 = sshll.u32 %s6, 4
      %s310 = int_to_ptr.hbm [resolvable:$true] %s309
      %312 = dma.vmem_to_hbm [thread:$0]  %s308, 128, %s310, [#allocation13]
    $region49: #{tpu_custom_call.1} parent=1 // pred_fallthru
      _
    // Predicated region
    $region50: #{tpu_custom_call.1} parent=1 // pred_check
      _
    $region51: #{tpu_custom_call.1} parent=1 // pred_check_branch
      %314 = sbr.rel (0) target = $region53
    $region52: #{tpu_custom_call.1} parent=1 // pred_region
      %316 = dma.done [#allocation4], 128
    $region53: #{tpu_custom_call.1} parent=1 // pred_fallthru
      _
    // Predicated region
    $region54: #{tpu_custom_call.1} parent=1 // pred_check
      _
    $region55: #{tpu_custom_call.1} parent=1 // pred_check_branch
      %318 = sbr.rel (0) target = $region57
    $region56: #{tpu_custom_call.1} parent=1 // pred_region
      %320 = dma.done [#allocation13], 128
    $region57: #{tpu_custom_call.1} parent=1 // pred_fallthru
      _
    %321 = vsyncpa [#allocation3], 1
    %322 = vsyncpa [#allocation6], 1
    %323 = vsyncpa [#allocation9], 1
    %324 = vsyncpa [#allocation4], 1
    %325 = vsyncpa [#allocation13], 1

</llo_original>
